<compile_context>
chip_gen: v7x
topology: tpu7x:2x2x1
jax: 0.10.0
libtpu: 0.0.40
codegen_flags: <defaults>
</compile_context>

<pallas_src>
import math
import functools

import jax
import jax.numpy as jnp
from jax.experimental import pallas as pl
from jax.experimental.pallas import tpu as pltpu


EPS = 1e-6
NUM_GROUPS = 32


# --------------------------------------------------------------------------- #
# Kernel 1: GroupNorm statistics (per batch element)
# --------------------------------------------------------------------------- #
def groupnorm_stats_kernel(x_ref, A_ref, stats_ref, acc_ref):
    # x_ref:    (1, TN, C) token tile
    # A_ref:    (C, C) group-averaging matrix (1/(cg*N) within a group, else 0)
    # stats_ref:(1, 2, C) output -> row 0 = mean, row 1 = inv_std  (resident over token axis)
    # acc_ref:  (2, C) f32 scratch accumulator [sum; sum_sq]
    nt = pl.program_id(1)

    @pl.when(nt == 0)
    def _():
        acc_ref[...] = jnp.zeros_like(acc_ref)

    x = x_ref[0].astype(jnp.float32)                      # (TN, C)
    sums = jnp.sum(x, axis=0, keepdims=True)              # (1, C)
    sumsq = jnp.sum(x * x, axis=0, keepdims=True)         # (1, C)
    acc_ref[...] += jnp.concatenate([sums, sumsq], axis=0)

    @pl.when(nt == pl.num_programs(1) - 1)
    def _():
        # One (2,C) x (C,C) matmul turns per-channel sums into per-group means /
        # E[x^2] broadcast back to channels (avoids in-kernel group reshapes).
        st = jnp.dot(acc_ref[...], A_ref[...], preferred_element_type=jnp.float32)
        mean = st[0:1, :]
        ex2 = st[1:2, :]
        # NOTE: single-pass E[x^2]-mean^2 variance in f32; acceptable here, but a
        # two-pass variance is safer for very large-magnitude activations.
        inv = jax.lax.rsqrt(ex2 - mean * mean + EPS)
        stats_ref[0] = jnp.concatenate([mean, inv], axis=0)


# --------------------------------------------------------------------------- #
# Kernel 2: normalize + fused q/k/v projection (one (C, 3C) matmul)
# --------------------------------------------------------------------------- #
def norm_qkv_kernel(x_ref, stats_ref, gamma_ref, beta_ref, wqkv_ref, bqkv_ref,
                    q_ref, k_ref, v_ref):
    c = x_ref.shape[-1]
    x = x_ref[0].astype(jnp.float32)                      # (TN, C)
    st = stats_ref[0]                                     # (2, C)
    mean = st[0:1, :]
    inv = st[1:2, :]
    h = (x - mean) * inv * gamma_ref[...] + beta_ref[...]  # (TN, C)

    # bf16 MXU operands, f32 accumulation. Softmax scale is pre-folded into the
    # q columns of wqkv / bqkv in the wrapper.
    qkv = jnp.dot(h.astype(jnp.bfloat16), wqkv_ref[...],
                  preferred_element_type=jnp.float32) + bqkv_ref[...]   # (TN, 3C)

    q_ref[0] = qkv[:, 0:c].astype(q_ref.dtype)
    k_ref[0] = qkv[:, c:2 * c].astype(k_ref.dtype)
    v_ref[0] = qkv[:, 2 * c:3 * c].astype(v_ref.dtype)


# --------------------------------------------------------------------------- #
# Kernel 3: flash attention (online softmax) + proj_out + residual
# --------------------------------------------------------------------------- #
def flash_attn_kernel(x_ref, q_ref, k_ref, v_ref, wp_ref, bp_ref, o_ref,
                      m_ref, l_ref, acc_ref):
    ki = pl.program_id(2)

    @pl.when(ki == 0)
    def _():
        m_ref[...] = jnp.full_like(m_ref, -jnp.inf)
        l_ref[...] = jnp.zeros_like(l_ref)
        acc_ref[...] = jnp.zeros_like(acc_ref)

    q = q_ref[0]                                          # (TQ, C) bf16 (scale folded)
    k = k_ref[0]                                          # (TK, C) bf16
    # Contract over the channel axis of both operands directly — no explicit k.T
    # (avoids an XLU transpose before the MXU).
    s = jax.lax.dot_general(q, k, (((1,), (1,)), ((), ())),
                            preferred_element_type=jnp.float32)          # (TQ, TK)

    m_prev = m_ref[...]
    m_new = jnp.maximum(m_prev, jnp.max(s, axis=-1, keepdims=True))
    alpha = jnp.exp(m_prev - m_new)
    p = jnp.exp(s - m_new)
    l_ref[...] = alpha * l_ref[...] + jnp.sum(p, axis=-1, keepdims=True)
    acc_ref[...] = alpha * acc_ref[...] + jnp.dot(
        p.astype(jnp.bfloat16), v_ref[0], preferred_element_type=jnp.float32)
    m_ref[...] = m_new

    @pl.when(ki == pl.num_programs(2) - 1)
    def _():
        # EUP approx reciprocal — separate VLIW slot, effectively free.
        attn = acc_ref[...] * pl.reciprocal(l_ref[...], approx=True)     # (TQ, C)
        out = jnp.dot(attn.astype(jnp.bfloat16), wp_ref[...],
                      preferred_element_type=jnp.float32) + bp_ref[...]
        o_ref[0] = (x_ref[0].astype(jnp.float32) + out).astype(o_ref.dtype)


# --------------------------------------------------------------------------- #
# Wrapper
# --------------------------------------------------------------------------- #
def _pick_tile(n, max_tile=256):
    """Largest tile <= max_tile that divides n (prefer multiples of 8)."""
    if n <= max_tile:
        return n
    for t in range(max_tile, 7, -1):
        if n % t == 0 and t % 8 == 0:
            return t
    return n  # fall back to a single full tile


def _attn_block_tokens(x_tok, params):
    """x_tok: (B, N, C) f32 tokens. Returns (B, N, C) in x_tok.dtype."""
    B, N, C = x_tok.shape
    assert C % NUM_GROUPS == 0, "GroupNorm(32) requires C to be a multiple of 32"
    cg = C // NUM_GROUPS

    # Group-averaging matrix: A[i, j] = 1/(cg*N) if channels i and j share a group.
    gid = jnp.arange(C) // cg
    A = (gid[:, None] == gid[None, :]).astype(jnp.float32) / float(cg * N)

    gamma = params["gamma"].reshape(1, C).astype(jnp.float32)
    beta = params["beta"].reshape(1, C).astype(jnp.float32)

    # Conv2d weight (C_out, C_in, 1, 1) -> (C_in, C_out) so `tokens @ W` works.
    scale = 1.0 / math.sqrt(C)  # softmax scale folded into the q projection
    wq = params["wq"].reshape(C, C).T * scale
    wk = params["wk"].reshape(C, C).T
    wv = params["wv"].reshape(C, C).T
    wqkv = jnp.concatenate([wq, wk, wv], axis=1).astype(jnp.bfloat16)     # (C, 3C)
    bqkv = jnp.concatenate(
        [params["bq"] * scale, params["bk"], params["bv"]]
    ).reshape(1, 3 * C).astype(jnp.float32)                               # (1, 3C)
    wp = params["wp"].reshape(C, C).T.astype(jnp.bfloat16)                # (C, C)
    bp = params["bp"].reshape(1, C).astype(jnp.float32)                   # (1, C)

    TN = _pick_tile(N, 256)   # token tile for stats / qkv projection
    TQ = _pick_tile(N, 256)   # query tile
    TK = _pick_tile(N, 256)   # kv tile
    NT, NQ, NK = N // TN, N // TQ, N // TK

    # ---- pass 1: GroupNorm stats (mean, inv_std) per batch ----
    stats = pl.pallas_call(
        groupnorm_stats_kernel,
        out_shape=jax.ShapeDtypeStruct((B, 2, C), jnp.float32),
        grid_spec=pltpu.PrefetchScalarGridSpec(
            num_scalar_prefetch=0,
            grid=(B, NT),
            in_specs=[
                pl.BlockSpec((1, TN, C), lambda b, nt: (b, nt, 0)),
                pl.BlockSpec((C, C), lambda b, nt: (0, 0)),
            ],
            out_specs=pl.BlockSpec((1, 2, C), lambda b, nt: (b, 0, 0)),
            scratch_shapes=[pltpu.VMEM((2, C), jnp.float32)],
        ),
        compiler_params=pltpu.CompilerParams(
            dimension_semantics=("parallel", "arbitrary")),
    )(x_tok, A)

    # ---- pass 2: normalize + fused qkv projection (bf16 q/k/v to HBM) ----
    q, k, v = pl.pallas_call(
        norm_qkv_kernel,
        out_shape=(
            jax.ShapeDtypeStruct((B, N, C), jnp.bfloat16),
            jax.ShapeDtypeStruct((B, N, C), jnp.bfloat16),
            jax.ShapeDtypeStruct((B, N, C), jnp.bfloat16),
        ),
        grid_spec=pltpu.PrefetchScalarGridSpec(
            num_scalar_prefetch=0,
            grid=(B, NT),
            in_specs=[
                pl.BlockSpec((1, TN, C), lambda b, nt: (b, nt, 0)),   # x
                pl.BlockSpec((1, 2, C), lambda b, nt: (b, 0, 0)),     # stats
                pl.BlockSpec((1, C), lambda b, nt: (0, 0)),           # gamma
                pl.BlockSpec((1, C), lambda b, nt: (0, 0)),           # beta
                pl.BlockSpec((C, 3 * C), lambda b, nt: (0, 0)),       # wqkv
                pl.BlockSpec((1, 3 * C), lambda b, nt: (0, 0)),       # bqkv
            ],
            out_specs=[
                pl.BlockSpec((1, TN, C), lambda b, nt: (b, nt, 0)),
                pl.BlockSpec((1, TN, C), lambda b, nt: (b, nt, 0)),
                pl.BlockSpec((1, TN, C), lambda b, nt: (b, nt, 0)),
            ],
        ),
        compiler_params=pltpu.CompilerParams(
            dimension_semantics=("parallel", "parallel")),
    )(x_tok, stats, gamma, beta, wqkv, bqkv)

    # ---- pass 3: flash attention + proj_out + residual ----
    # Grid-invariant weight/bias blocks are small relative to VMEM at these tile
    # sizes; per-step footprint is a few hundred KiB, safe on v5e/v6e/v7x defaults.
    out_tok = pl.pallas_call(
        flash_attn_kernel,
        out_shape=jax.ShapeDtypeStruct((B, N, C), x_tok.dtype),
        grid_spec=pltpu.PrefetchScalarGridSpec(
            num_scalar_prefetch=0,
            grid=(B, NQ, NK),
            in_specs=[
                pl.BlockSpec((1, TQ, C), lambda b, qi, ki: (b, qi, 0)),  # x (residual)
                pl.BlockSpec((1, TQ, C), lambda b, qi, ki: (b, qi, 0)),  # q
                pl.BlockSpec((1, TK, C), lambda b, qi, ki: (b, ki, 0)),  # k
                pl.BlockSpec((1, TK, C), lambda b, qi, ki: (b, ki, 0)),  # v
                pl.BlockSpec((C, C), lambda b, qi, ki: (0, 0)),          # wp
                pl.BlockSpec((1, C), lambda b, qi, ki: (0, 0)),          # bp
            ],
            out_specs=pl.BlockSpec((1, TQ, C), lambda b, qi, ki: (b, qi, 0)),
            scratch_shapes=[
                pltpu.VMEM((TQ, 1), jnp.float32),   # running max m
                pltpu.VMEM((TQ, 1), jnp.float32),   # running denom l
                pltpu.VMEM((TQ, C), jnp.float32),   # output accumulator
            ],
        ),
        compiler_params=pltpu.CompilerParams(
            dimension_semantics=("parallel", "parallel", "arbitrary")),
    )(x_tok, q, k, v, wp, bp)

    return out_tok


def attn_block_pallas_nhwc(x_nhwc, params):
    """Preferred entry point: NHWC in / NHWC out — no HBM transpose round trips."""
    B, H, W, C = x_nhwc.shape
    out_tok = _attn_block_tokens(x_nhwc.reshape(B, H * W, C), params)
    return out_tok.reshape(B, H, W, C)


def attn_block_pallas(x_nchw, params):
    """NCHW interface matching the PyTorch module (adds layout transposes)."""
    B, C, H, W = x_nchw.shape
    x_nhwc = jnp.transpose(x_nchw, (0, 2, 3, 1))
    out_nhwc = attn_block_pallas_nhwc(x_nhwc, params)
    return jnp.transpose(out_nhwc, (0, 3, 1, 2))


# --------------------------------------------------------------------------- #
# Pure-JAX reference (mirrors the PyTorch module, f32 throughout)
# --------------------------------------------------------------------------- #
def attn_block_reference(x_nchw, params):
    B, C, H, W = x_nchw.shape
    N = H * W
    x = jnp.transpose(x_nchw, (0, 2, 3, 1)).reshape(B, N, C).astype(jnp.float32)

    cg = C // NUM_GROUPS
    xg = x.reshape(B, N, NUM_GROUPS, cg)
    mean = jnp.mean(xg, axis=(1, 3), keepdims=True)
    var = jnp.mean((xg - mean) ** 2, axis=(1, 3), keepdims=True)
    h = ((xg - mean) / jnp.sqrt(var + EPS)).reshape(B, N, C)
    h = h * params["gamma"].reshape(1, 1, C) + params["beta"].reshape(1, 1, C)

    def lin(t, w, b):
        return jnp.einsum("bnc,oc->bno", t, w.reshape(C, C)) + b.reshape(1, 1, C)

    q = lin(h, params["wq"], params["bq"])
    k = lin(h, params["wk"], params["bk"])
    v = lin(h, params["wv"], params["bv"])

    s = jnp.einsum("bqc,bkc->bqk", q, k) / math.sqrt(C)
    p = jax.nn.softmax(s, axis=-1)
    a = jnp.einsum("bqk,bkc->bqc", p, v)

    out = lin(a, params["wp"], params["bp"])
    out = x + out
    return jnp.transpose(out.reshape(B, H, W, C), (0, 3, 1, 2))


def init_params(key, C):
    ks = jax.random.split(key, 8)
    bound = 1.0 / math.sqrt(C)  # PyTorch Conv2d default init range
    return {
        "gamma": jnp.ones((C,), jnp.float32),
        "beta": jnp.zeros((C,), jnp.float32),
        "wq": jax.random.uniform(ks[0], (C, C, 1, 1), jnp.float32, -bound, bound),
        "bq": jax.random.uniform(ks[1], (C,), jnp.float32, -bound, bound),
        "wk": jax.random.uniform(ks[2], (C, C, 1, 1), jnp.float32, -bound, bound),
        "bk": jax.random.uniform(ks[3], (C,), jnp.float32, -bound, bound),
        "wv": jax.random.uniform(ks[4], (C, C, 1, 1), jnp.float32, -bound, bound),
        "bv": jax.random.uniform(ks[5], (C,), jnp.float32, -bound, bound),
        "wp": jax.random.uniform(ks[6], (C, C, 1, 1), jnp.float32, -bound, bound),
        "bp": jax.random.uniform(ks[7], (C,), jnp.float32, -bound, bound),
    }


if __name__ == "__main__":
    # GroupNorm uses num_groups=32, so in_channels must be a multiple of 32.
    B, C, H, W = 2, 32, 8, 8
    key = jax.random.PRNGKey(0)
    kx, kp = jax.random.split(key)
    x = jax.random.normal(kx, (B, C, H, W), jnp.float32)
    params = init_params(kp, C)

    out = attn_block_pallas(x, params)
    out = jax.block_until_ready(out)

    ref = attn_block_reference(x, params)
    assert out.shape == (B, C, H, W)
    max_err = float(jnp.max(jnp.abs(out - ref)))
    # bf16 MXU operands (f32 accumulation) -> slightly looser tolerance than pure f32.
    assert jnp.allclose(out, ref, atol=2e-2, rtol=2e-2), f"mismatch vs reference (max abs err {max_err})"

    print("KERNEL_OK")
</pallas_src>

<mosaic_0001>
module attributes {stable_mosaic.version = 11 : i64} {
  func.func @groupnorm_stats_kernel(%arg0: i32, %arg1: i32, %arg2: memref<1x64x32xf32, #tpu.memory_space<vmem>>, %arg3: memref<32x32xf32, #tpu.memory_space<vmem>>, %arg4: memref<1x2x32xf32, #tpu.memory_space<vmem>>, %arg5: memref<2x32xf32, #tpu.memory_space<vmem>>) attributes {dimension_semantics = [#tpu.dimension_semantics<parallel>, #tpu.dimension_semantics<arbitrary>], iteration_bounds = array<i64: 2, 1>, scalar_prefetch = 0 : i64, scratch_operands = 1 : i64, tpu.core_type = #tpu.core_type<tc>, window_params = [{transform_indices = @transform_0, window_bounds = array<i64: 1, 64, 32>}, {pipeline_mode = #tpu.pipeline_mode<synchronous>, transform_indices = @transform_1, window_bounds = array<i64: 32, 32>}, {transform_indices = @transform_2, window_bounds = array<i64: 1, 2, 32>}]} {
    %c0_i32 = arith.constant 0 : i32
    %0 = arith.cmpi eq, %arg1, %c0_i32 : i32
    %1 = arith.extui %0 : i1 to i32
    %c0_i32_0 = arith.constant 0 : i32
    %2 = arith.cmpi ne, %1, %c0_i32_0 : i32
    scf.if %2 {
      %cst_10 = arith.constant 0.000000e+00 : f32
      %17 = vector.broadcast %cst_10 : f32 to vector<2x32xf32>
      %c0_11 = arith.constant 0 : index
      %c0_12 = arith.constant 0 : index
      %18 = vector.load %arg5[%c0_11, %c0_12] : memref<2x32xf32, #tpu.memory_space<vmem>>, vector<2x32xf32>
      tpu.vector_store %arg5[%c0_11, %c0_12], %17 {strides = array<i32>} : memref<2x32xf32, #tpu.memory_space<vmem>>, vector<2x32xf32>,
    } else {
    }
    %c0 = arith.constant 0 : index
    %c0_1 = arith.constant 0 : index
    %c0_2 = arith.constant 0 : index
    %3 = vector.load %arg2[%c0, %c0_1, %c0_2] : memref<1x64x32xf32, #tpu.memory_space<vmem>>, vector<1x64x32xf32>
    %4 = vector.shape_cast %3 : vector<1x64x32xf32> to vector<64x32xf32>
    %cst = arith.constant dense<0.000000e+00> : vector<32xf32>
    %5 = vector.multi_reduction <add>, %4, %cst [0] : vector<64x32xf32> to vector<32xf32>
    %6 = vector.shape_cast %5 : vector<32xf32> to vector<1x32xf32>
    %7 = arith.mulf %4, %4 : vector<64x32xf32>
    %cst_3 = arith.constant dense<0.000000e+00> : vector<32xf32>
    %8 = vector.multi_reduction <add>, %7, %cst_3 [0] : vector<64x32xf32> to vector<32xf32>
    %9 = vector.shape_cast %8 : vector<32xf32> to vector<1x32xf32>
    %c0_4 = arith.constant 0 : index
    %c0_5 = arith.constant 0 : index
    %10 = vector.load %arg5[%c0_4, %c0_5] : memref<2x32xf32, #tpu.memory_space<vmem>>, vector<2x32xf32>
    %11 = tpu.concatenate %6, %9 in 0 : vector<1x32xf32>, vector<1x32xf32> -> vector<2x32xf32>
    %12 = arith.addf %10, %11 : vector<2x32xf32>
    %c0_6 = arith.constant 0 : index
    %c0_7 = arith.constant 0 : index
    %13 = vector.load %arg5[%c0_6, %c0_7] : memref<2x32xf32, #tpu.memory_space<vmem>>, vector<2x32xf32>
    tpu.vector_store %arg5[%c0_6, %c0_7], %12 {strides = array<i32>} : memref<2x32xf32, #tpu.memory_space<vmem>>, vector<2x32xf32>,
    %c0_i32_8 = arith.constant 0 : i32
    %14 = arith.cmpi eq, %arg1, %c0_i32_8 : i32
    %15 = arith.extui %14 : i1 to i32
    %c0_i32_9 = arith.constant 0 : i32
    %16 = arith.cmpi ne, %15, %c0_i32_9 : i32
    scf.if %16 {
      %c0_10 = arith.constant 0 : index
      %c0_11 = arith.constant 0 : index
      %17 = vector.load %arg5[%c0_10, %c0_11] : memref<2x32xf32, #tpu.memory_space<vmem>>, vector<2x32xf32>
      %c0_12 = arith.constant 0 : index
      %c0_13 = arith.constant 0 : index
      %18 = vector.load %arg3[%c0_12, %c0_13] : memref<32x32xf32, #tpu.memory_space<vmem>>, vector<32x32xf32>
      %cst_14 = arith.constant dense<0.000000e+00> : vector<2x32xf32>
      %19 = tpu.matmul %17, %18, %cst_14 {dimension_numbers = #tpu.dot_dimension_numbers<[1], [0], [0], [1], [0, 0, 1, 1], [], []>} : vector<2x32xf32>, vector<32x32xf32>, vector<2x32xf32> -> vector<2x32xf32>
      %20 = vector.extract_strided_slice %19 {offsets = [0, 0], sizes = [1, 32], strides = [1, 1]} : vector<2x32xf32> to vector<1x32xf32>
      %21 = vector.extract_strided_slice %19 {offsets = [1, 0], sizes = [1, 32], strides = [1, 1]} : vector<2x32xf32> to vector<1x32xf32>
      %22 = arith.mulf %20, %20 : vector<1x32xf32>
      %23 = arith.subf %21, %22 : vector<1x32xf32>
      %cst_15 = arith.constant 9.99999997E-7 : f32
      %24 = vector.broadcast %cst_15 : f32 to vector<1x32xf32>
      %25 = arith.addf %23, %24 : vector<1x32xf32>
      %26 = math.rsqrt %25 : vector<1x32xf32>
      %27 = tpu.concatenate %20, %26 in 0 : vector<1x32xf32>, vector<1x32xf32> -> vector<2x32xf32>
      %c0_16 = arith.constant 0 : index
      %c0_17 = arith.constant 0 : index
      %c0_18 = arith.constant 0 : index
      %28 = vector.load %arg4[%c0_16, %c0_17, %c0_18] : memref<1x2x32xf32, #tpu.memory_space<vmem>>, vector<1x2x32xf32>
      %29 = vector.shape_cast %28 : vector<1x2x32xf32> to vector<2x32xf32>
      %30 = vector.shape_cast %27 : vector<2x32xf32> to vector<1x2x32xf32>
      tpu.vector_store %arg4[%c0_16, %c0_17, %c0_18], %30 {strides = array<i32>} : memref<1x2x32xf32, #tpu.memory_space<vmem>>, vector<1x2x32xf32>,
    } else {
    }
    return
  }
  func.func @transform_0(%arg0: i32, %arg1: i32) -> (i32, i32, i32) {
    %c0_i32 = arith.constant 0 : i32
    %c0_i32_0 = arith.constant 0 : i32
    return %arg0, %arg1, %c0_i32 : i32, i32, i32
  }
  func.func @transform_1(%arg0: i32, %arg1: i32) -> (i32, i32) {
    %c0_i32 = arith.constant 0 : i32
    %c0_i32_0 = arith.constant 0 : i32
    %c0_i32_1 = arith.constant 0 : i32
    return %c0_i32, %c0_i32_0 : i32, i32
  }
  func.func @transform_2(%arg0: i32, %arg1: i32) -> (i32, i32, i32) {
    %c0_i32 = arith.constant 0 : i32
    %c0_i32_0 = arith.constant 0 : i32
    %c0_i32_1 = arith.constant 0 : i32
    return %arg0, %c0_i32, %c0_i32_0 : i32, i32, i32
  }
}

</mosaic_0001>

<llo_original>
// kernel: tpu_custom_call.1
$region0: #{tpu_custom_call.1}
  #allocation0 [shape = 'u32[]', space=smem, size = 0x4, offset = 0x4, fixed_abs, tag = 'smem constant byte address 0x4 - core index']
  #allocation1 [shape = 'u32[144,128]{1,0:T(1,128)}', space=vmem, size = 0x12000, scoped, tag = 'internal scratch']
  #allocation2 [shape = 'f32[2,32]{1,0:T(2,128)}', space=vmem, size = 0x400, scoped, tag = 'scratch operand']
  %s0 = inlined_call_operand.vmem [shape: f32[2,64,32], index: 0, kind: input, shape index: {}]
  %s1 = inlined_call_operand.vmem [shape: f32[32,32], index: 1, kind: input, shape index: {}]
  %s2 = inlined_call_operand.hbm [shape: f32[2,2,32], index: 2, kind: output, shape index: {}]
  %s3 = sld [smem:[#allocation0]]
  $region49: #{tpu_custom_call.1} parent=0
    _
  %s5 = ssub.s32 1, %s3
  %s6 = scalar_select 0, %s5, %s3
  $region1: #{tpu_custom_call.1} parent=0
    #allocation3 [shape = 'u8[2048]{0}', space=vmem, size = 0x800, scoped, tag = 'output window, operand 0']
    #allocation4 [shape = 's32[2]{0}', space=sflag, size = 0x8, scoped, tag = 'scoped memory for tpu_custom_call.1']
    %7 = vsyncpa [#allocation4], 0
    %s8 = scalar_lea.sflag [#allocation4], 1
    %9 = vsyncpa %s8, 0
    loop: start=0, step=1, limit=4
    $region2: #{tpu_custom_call.1} parent=1 // loop_pre_header
      _
    $region3: #{tpu_custom_call.1} parent=1 // loop_header
      %s11 = sphi 0, %s15
      %p12 = scmp.ge.s32.totalorder %s11, 4
      %s18 = sphi 0, %s30
      %s19 = sphi 0, %s26
      %s20 = sphi 0, %s18
      %s21 = sphi 0, %s19
      %s22 = sphi 0, %s20
      %s23 = sphi 0, %s21
      %s35 = sphi 0, %s37
      %s38 = sphi 0, %s35
      %s39 = sphi 0, %s38
      %s55 = sphi 0, %s39
      %s59 = sphi 0, %s59
      %s61 = sphi 0, %s59
      %s62 = sphi 0, %s61
      %s76 = sphi 0, %s62
      %s82 = sphi 0, %s84
      %s85 = sphi 0, %s82
      %s86 = sphi 0, %s85
      %s102 = sphi 0, %s86
    $region4: #{tpu_custom_call.1} parent=1 // loop_header_branch
      %14 = sbr.rel (%p12) target = $region8
    $region5: #{tpu_custom_call.1} parent=1 // loop_body
      %s16 = ssub.s32 %s11, 1
      %s17 = ssub.s32 %s11, 2
      %s24 = sadd.s32 1, %s19
      %p25 = scmp.ge.s32.totalorder %s24, 1
      %s26 = scalar_select %p25, 0, %s24
      %s27 = sadd.s32 1, %s18
      %s28 = scalar_select %p25, %s27, %s18
      %p29 = scmp.ge.s32.totalorder %s28, 2
      %s30 = scalar_select %p29, 0, %s28
      %s31 = ssub.s32 %s18, %s30
      %s32 = ssub.s32 %s19, %s26
      %s33 = sor.u32 %s31, %s32
      %p34 = scmp.eq.s32.totalorder %s33, 0
      %s36 = sadd.s32 %s35, 1
      %s37 = scalar_select %p34, %s35, %s36
      %p40 = pneg %p34
      %p41 = scmp.eq.s32.totalorder %s11, 1
      %p42 = por %p40, %p41
      %p43 = scmp.ne.s32.totalorder %s35, %s38
      %p44 = scmp.eq.s32.totalorder %s11, 0
      %p45 = por %p43, %p44
      %p46 = scmp.ne.s32.totalorder %s35, %s38
      %p47 = scmp.eq.s32.totalorder %s16, 1
      %p48 = por %p46, %p47
      %p49 = scmp.ne.s32.totalorder %s38, %s39
      %p50 = scmp.eq.s32.totalorder %s16, 0
      %p51 = por %p49, %p50
      %p52 = scmp.ne.s32.totalorder %s38, %s39
      %p53 = scmp.eq.s32.totalorder %s17, 1
      %p54 = por %p52, %p53
      %p56 = scmp.ne.s32.totalorder %s39, %s55
      %p57 = scmp.eq.s32.totalorder %s17, 0
      %p58 = por %p56, %p57
      %s60 = sadd.s32 %s59, 1
      %p63 = scmp.eq.s32.totalorder %s11, 1
      %p64 = scmp.ne.s32.totalorder %s59, %s61
      %p65 = scmp.eq.s32.totalorder %s11, 0
      %p66 = por %p64, %p65
      %p67 = scmp.ne.s32.totalorder %s59, %s61
      %p68 = scmp.eq.s32.totalorder %s16, 1
      %p69 = por %p67, %p68
      %p70 = scmp.ne.s32.totalorder %s61, %s62
      %p71 = scmp.eq.s32.totalorder %s16, 0
      %p72 = por %p70, %p71
      %p73 = scmp.ne.s32.totalorder %s61, %s62
      %p74 = scmp.eq.s32.totalorder %s17, 1
      %p75 = por %p73, %p74
      %p77 = scmp.ne.s32.totalorder %s62, %s76
      %p78 = scmp.eq.s32.totalorder %s17, 0
      %p79 = por %p77, %p78
      %s80 = ssub.s32 %s18, %s30
      %p81 = scmp.eq.s32.totalorder %s80, 0
      %s83 = sadd.s32 %s82, 1
      %s84 = scalar_select %p81, %s82, %s83
      %p87 = pneg %p81
      %p88 = scmp.eq.s32.totalorder %s11, 1
      %p89 = por %p87, %p88
      %p90 = scmp.ne.s32.totalorder %s82, %s85
      %p91 = scmp.eq.s32.totalorder %s11, 0
      %p92 = por %p90, %p91
      %p93 = scmp.ne.s32.totalorder %s82, %s85
      %p94 = scmp.eq.s32.totalorder %s16, 1
      %p95 = por %p93, %p94
      %p96 = scmp.ne.s32.totalorder %s85, %s86
      %p97 = scmp.eq.s32.totalorder %s16, 0
      %p98 = por %p96, %p97
      %p99 = scmp.ne.s32.totalorder %s85, %s86
      %p100 = scmp.eq.s32.totalorder %s17, 1
      %p101 = por %p99, %p100
      %p103 = scmp.ne.s32.totalorder %s86, %s102
      %p104 = scmp.eq.s32.totalorder %s17, 0
      %p105 = por %p103, %p104
      %p106 = scmp.le.s32.totalorder 1, %s11
      %p107 = scmp.lt.s32.totalorder %s11, 3
      %p108 = pnand %p106, %p107
      %p109 = pneg %p108
      // Predicated region
      $region9: #{tpu_custom_call.1} parent=5 // pred_check
        _
      $region10: #{tpu_custom_call.1} parent=5 // pred_check_branch
        %111 = sbr.rel (%p108) target = $region12
      $region11: #{tpu_custom_call.1} parent=5 // pred_region
        %s112 = ssub.s32 %s11, 1
        // Predicated region
        $region13: #{tpu_custom_call.1} parent=11 // pred_check
          %p113 = pneg %p72
        $region14: #{tpu_custom_call.1} parent=11 // pred_check_branch
          %115 = sbr.rel (%p113) target = $region16
        $region15: #{tpu_custom_call.1} parent=11 // pred_region
          _
        $region16: #{tpu_custom_call.1} parent=11 // pred_fallthru
          _
      $region12: #{tpu_custom_call.1} parent=5 // pred_fallthru
        _
      %p116 = scmp.lt.s32.totalorder %s11, 2
      // Predicated region
      $region17: #{tpu_custom_call.1} parent=5 // pred_check
        %p117 = pneg %p116
      $region18: #{tpu_custom_call.1} parent=5 // pred_check_branch
        %119 = sbr.rel (%p117) target = $region20
      $region19: #{tpu_custom_call.1} parent=5 // pred_region
        // Predicated region
        $region21: #{tpu_custom_call.1} parent=19 // pred_check
          %p120 = pneg %p45
        $region22: #{tpu_custom_call.1} parent=19 // pred_check_branch
          %122 = sbr.rel (%p120) target = $region24
        $region23: #{tpu_custom_call.1} parent=19 // pred_region
          %s123 = smul.u32 8, %s19
          %p124 = scmp.lt.s32.totalorder %s18, 1
          %s125 = scalar_select %p124, %s18, 1
          %p126 = scmp.lt.s32.totalorder %s123, 7
          %s127 = scalar_select %p126, %s123, 7
          %s128 = smul.addr %s125, 8
          %s129 = sadd.s32 %s127, %s128
          %s130 = smul.addr %s129, 8
          %s131 = scalar_lea.vmem %s0, %s130
          %s132 = smul.u32 8, %s19
        $region24: #{tpu_custom_call.1} parent=19 // pred_fallthru
          _
      $region20: #{tpu_custom_call.1} parent=5 // pred_fallthru
        _
      %p133 = scmp.le.s32.totalorder 1, %s11
      %p134 = scmp.lt.s32.totalorder %s11, 3
      %p135 = pnand %p133, %p134
      %p136 = pneg %p135
      // Predicated region
      $region25: #{tpu_custom_call.1} parent=5 // pred_check
        _
      $region26: #{tpu_custom_call.1} parent=5 // pred_check_branch
        %138 = sbr.rel (%p135) target = $region28
      $region27: #{tpu_custom_call.1} parent=5 // pred_region
        %s139 = ssub.s32 %s11, 1
        %s140 = smul.u32 8, %s21
        %p141 = scmp.lt.s32.totalorder %s20, 1
        %s142 = scalar_select %p141, %s20, 1
        %p143 = scmp.lt.s32.totalorder %s140, 7
        %s144 = scalar_select %p143, %s140, 7
        %s145 = smul.addr %s142, 8
        %s146 = sadd.s32 %s144, %s145
        %s147 = smul.addr %s146, 8
        %s148 = scalar_lea.vmem %s0, %s147
        %p149 = pneg %p51
        %p150 = pneg %p48
        %p151 = pneg %p72
        %p152 = pneg %p69
        %p153 = pneg %p98
        %p154 = pneg %p95
        %s155 = sand.u32 %s85, 1
        %s156 = scalar_lea.sflag [#allocation4], %s155
        %s157 = sand.u32 %s85, 1
        %s158 = smul.addr %s157, 2
        %s159 = scalar_lea.vmem [#allocation3], %s158
        %s160 = smul.u32 8, %s21
        %p161 = scmp.lt.s32.totalorder %s20, 1
        %s162 = scalar_select %p161, %s20, 1
        %p163 = scmp.lt.s32.totalorder %s160, 7
        %s164 = scalar_select %p163, %s160, 7
        %s165 = smul.addr %s162, 8
        %s166 = sadd.s32 %s164, %s165
        %s167 = smul.addr %s166, 8
        %s168 = scalar_lea.vmem %s0, %s167
        %s169 = smul.u32 8, %s21
        %p170 = scmp.eq.s32.totalorder %s21, 0
        // Predicated region
        $region29: #{tpu_custom_call.1} parent=27 // pred_check
          %p171 = pneg %p170
        $region30: #{tpu_custom_call.1} parent=27 // pred_check_branch
          %173 = sbr.rel (%p171) target = $region32
        $region31: #{tpu_custom_call.1} parent=27 // pred_region
          %vm174 = vcmask 254976
          %175 = vst.msk [vmem:[#allocation2] sm:$0x3] %vm174, 0.0
        $region32: #{tpu_custom_call.1} parent=27 // pred_fallthru
          _
        %v176 = vld [vmem:[%s168] sm:$0xff]
        %v177 = vld [vmem:[%s168 + $0x8] sm:$0xff]
        %v178 = vld [vmem:[%s168 + $0x10] sm:$0xff]
        %v179 = vld [vmem:[%s168 + $0x18] sm:$0xff]
        %v180 = vld [vmem:[%s168 + $0x20] sm:$0xff]
        %v181 = vld [vmem:[%s168 + $0x28] sm:$0xff]
        %v182 = vld [vmem:[%s168 + $0x30] sm:$0xff]
        %v183 = vld [vmem:[%s168 + $0x38] sm:$0xff]
        %vm184 = vcmask 261120
        %v185 = vsel %vm184, %v176, 0.0
        %v186 = vsel %vm184, %v177, 0.0
        %v187 = vadd.f32 %v185, %v186
        %v188 = vsel %vm184, %v178, 0.0
        %v189 = vadd.f32 %v187, %v188
        %v190 = vsel %vm184, %v179, 0.0
        %v191 = vadd.f32 %v189, %v190
        %v192 = vsel %vm184, %v180, 0.0
        %v193 = vadd.f32 %v191, %v192
        %v194 = vsel %vm184, %v181, 0.0
        %v195 = vadd.f32 %v193, %v194
        %v196 = vsel %vm184, %v182, 0.0
        %v197 = vadd.f32 %v195, %v196
        %v198 = vsel %vm184, %v183, 0.0
        %v199 = vadd.f32 %v197, %v198
        %v200 = vrot.slane %v199, 4
        %v201 = vadd.f32 %v199, %v200
        %v202 = vrot.slane %v201, 2
        %v203 = vadd.f32 %v201, %v202
        %v204 = vrot.slane %v203, 1
        %v205 = vadd.f32 %v203, %v204
        %v206 = vmul.f32 %v176, %v176
        %v207 = vmul.f32 %v177, %v177
        %v208 = vmul.f32 %v178, %v178
        %v209 = vmul.f32 %v179, %v179
        %v210 = vmul.f32 %v180, %v180
        %v211 = vmul.f32 %v181, %v181
        %v212 = vmul.f32 %v182, %v182
        %v213 = vmul.f32 %v183, %v183
        %v214 = vsel %vm184, %v206, 0.0
        %v215 = vsel %vm184, %v207, 0.0
        %v216 = vadd.f32 %v214, %v215
        %v217 = vsel %vm184, %v208, 0.0
        %v218 = vadd.f32 %v216, %v217
        %v219 = vsel %vm184, %v209, 0.0
        %v220 = vadd.f32 %v218, %v219
        %v221 = vsel %vm184, %v210, 0.0
        %v222 = vadd.f32 %v220, %v221
        %v223 = vsel %vm184, %v211, 0.0
        %v224 = vadd.f32 %v222, %v223
        %v225 = vsel %vm184, %v212, 0.0
        %v226 = vadd.f32 %v224, %v225
        %v227 = vsel %vm184, %v213, 0.0
        %v228 = vadd.f32 %v226, %v227
        %v229 = vrot.slane %v228, 4
        %v230 = vadd.f32 %v228, %v229
        %v231 = vrot.slane %v230, 2
        %v232 = vadd.f32 %v230, %v231
        %v233 = vrot.slane %v232, 1
        %v234 = vadd.f32 %v232, %v233
        %v235 = vld [vmem:[#allocation2] sm:$0x3]
        %vm236 = vcmask 1040384
        %v237 = vsel %vm236, %v205, %v234
        %v238 = vadd.f32 %v235, %v237
        %vm239 = vcmask 254976
        %240 = vst.msk [vmem:[#allocation2] sm:$0x3] %vm239, %v238
        // Predicated region
        $region33: #{tpu_custom_call.1} parent=27 // pred_check
          %p241 = pneg %p170
        $region34: #{tpu_custom_call.1} parent=27 // pred_check_branch
          %243 = sbr.rel (%p241) target = $region36
        $region35: #{tpu_custom_call.1} parent=27 // pred_region
          %v244 = vld [vmem:[#allocation2] sm:$0x3]
          %v245 = vld [vmem:[%s1] sm:$0xff]
          %v246 = vld [vmem:[%s1 + $0x8] sm:$0xff]
          %v247 = vld [vmem:[%s1 + $0x10] sm:$0xff]
          %v248 = vld [vmem:[%s1 + $0x18] sm:$0xff]
          %v250 = vsel %vm184, %v244, 0
          %252 = vmatprep.subr.mxu0 0.0
          %253 = vmatpush1.msra.mxu0 %v245
          %254 = vmatprep.subr.mxu0 0.0
          %255 = vmatpush1.msra.mxu0 %v246
          %256 = vmatprep.subr.mxu0 0.0
          %257 = vmatpush1.msra.mxu0 %v247
          %258 = vmatprep.subr.mxu0 0.0
          %259 = vmatpush1.msra.mxu0 %v248
          %260 = vmatprep.subr.mxu0 0.0
          %261 = vmatpush1.msra.mxu0 0.0
          %262 = vmatprep.subr.mxu0 0.0
          %263 = vmatpush1.msra.mxu0 0.0
          %264 = vmatprep.subr.mxu0 0.0
          %265 = vmatpush1.msra.mxu0 0.0
          %266 = vmatprep.subr.mxu0 0.0
          %267 = vmatpush1.msra.mxu0 0.0
          %268 = vmatprep.subr.mxu0 0.0
          %269 = vmatpush1.msra.mxu0 0.0
          %270 = vmatprep.subr.mxu0 0.0
          %271 = vmatpush1.msra.mxu0 0.0
          %272 = vmatprep.subr.mxu0 0.0
          %273 = vmatpush1.msra.mxu0 0.0
          %274 = vmatprep.subr.mxu0 0.0
          %275 = vmatpush1.msra.mxu0 0.0
          %276 = vmatprep.subr.mxu0 0.0
          %277 = vmatpush1.msra.mxu0 0.0
          %278 = vmatprep.subr.mxu0 0.0
          %279 = vmatpush1.msra.mxu0 0.0
          %280 = vmatprep.subr.mxu0 0.0
          %281 = vmatpush1.msra.mxu0 0.0
          %282 = vmatprep.subr.mxu0 0.0
          %283 = vmatpush1.msra.mxu0 0.0
          %284 = vmatprep.subr.mxu0 0.0
          %285 = vmatpush1.msra.mxu0 0.0
          %286 = vmatprep.subr.mxu0 0.0
          %287 = vmatpush1.msra.mxu0 0.0
          %288 = vmatprep.subr.mxu0 0.0
          %289 = vmatpush1.msra.mxu0 0.0
          %290 = vmatprep.subr.mxu0 0.0
          %291 = vmatpush1.msra.mxu0 0.0
          %292 = vmatprep.subr.mxu0 0.0
          %293 = vmatpush1.msra.mxu0 0.0
          %294 = vmatprep.subr.mxu0 0.0
          %295 = vmatpush1.msra.mxu0 0.0
          %296 = vmatprep.subr.mxu0 0.0
          %297 = vmatpush1.msra.mxu0 0.0
          %298 = vmatprep.subr.mxu0 0.0
          %299 = vmatpush1.msra.mxu0 0.0
          %300 = vmatprep.subr.mxu0 0.0
          %301 = vmatpush1.msra.mxu0 0.0
          %302 = vmatprep.subr.mxu0 0.0
          %303 = vmatpush1.msra.mxu0 0.0
          %304 = vmatprep.subr.mxu0 0.0
          %305 = vmatpush1.msra.mxu0 0.0
          %306 = vmatprep.subr.mxu0 0.0
          %307 = vmatpush1.msra.mxu0 0.0
          %308 = vmatprep.subr.mxu0 0.0
          %309 = vmatpush1.msra.mxu0 0.0
          %310 = vmatprep.subr.mxu0 0.0
          %311 = vmatpush1.msra.mxu0 0.0
          %312 = vmatprep.subr.mxu0 0.0
          %313 = vmatpush1.msra.mxu0 0.0
          %314 = vmatprep.subr.mxu0 0.0
          %315 = vmatpush1.msra.mxu0 0.0
          %316 = vmatprep.mubr.f32.mxu0 0.0
          %317 = vmatmul.mubr.f32.gmra.mrb[0].mxu0 %v250
          %v318 = vpop.f32.mrb[0].mxu0
          %v319 = vadd.f32 0.0, %v318
          %v320 = vpop.f32.mrb[0].mxu0
          %321 = vdwg.mxu0
          %v322 = vmul.f32 %v319, %v319
          %v324 = vrot.slane %v322, 7
          %v326 = vsub.f32 %v319, %v324
          %v327 = vadd.f32 %v326, 1e-06
          %v328 = vrsqrt.pop %v327
          %v329 = vsel %vm236, %v319, %v328
          %330 = vst.msk [vmem:[%s159] sm:$0x3] %vm239, %v329
        $region36: #{tpu_custom_call.1} parent=27 // pred_fallthru
          _
        %s331 = sand.u32 %s85, 1
        %s332 = scalar_lea.sflag [#allocation4], %s331
        %s333 = sand.u32 %s85, 1
        %s334 = smul.addr %s333, 2
        %s335 = scalar_lea.vmem [#allocation3], %s334
        // Predicated region
        $region37: #{tpu_custom_call.1} parent=27 // pred_check
          %p336 = pneg %p95
        $region38: #{tpu_custom_call.1} parent=27 // pred_check_branch
          %338 = sbr.rel (%p336) target = $region40
        $region39: #{tpu_custom_call.1} parent=27 // pred_region
          %s340 = ssub.s32 32, 32
          %341 = vsyncadd %s332, %s340
          %s342 = smul.addr %s20, 32
          %s343 = scalar_lea.hbm %s2, %s342
          %s345 = sshll.u32 %s335, 4
          %s346 = int_to_ptr.vmem [resolvable:$true] %s345
          %348 = dma.vmem_to_hbm [thread:$0]  %s346, 32, %s343, %s332
        $region40: #{tpu_custom_call.1} parent=27 // pred_fallthru
          _
      $region28: #{tpu_custom_call.1} parent=5 // pred_fallthru
        _
      %p349 = scmp.le.s32.totalorder 2, %s11
      // Predicated region
      $region41: #{tpu_custom_call.1} parent=5 // pred_check
        %p350 = pneg %p349
      $region42: #{tpu_custom_call.1} parent=5 // pred_check_branch
        %352 = sbr.rel (%p350) target = $region44
      $region43: #{tpu_custom_call.1} parent=5 // pred_region
        %s353 = ssub.s32 %s11, 2
        // Predicated region
        $region45: #{tpu_custom_call.1} parent=43 // pred_check
          %p354 = pneg %p101
        $region46: #{tpu_custom_call.1} parent=43 // pred_check_branch
          %356 = sbr.rel (%p354) target = $region48
        $region47: #{tpu_custom_call.1} parent=43 // pred_region
          %s357 = sand.u32 %s86, 1
          %s358 = scalar_lea.sflag [#allocation4], %s357
          %s359 = sand.u32 %s86, 1
          %s360 = smul.addr %s359, 2
          %s361 = scalar_lea.vmem [#allocation3], %s360
          %362 = dma.done %s358, 32
        $region48: #{tpu_custom_call.1} parent=43 // pred_fallthru
          _
      $region44: #{tpu_custom_call.1} parent=5 // pred_fallthru
        _
    $region6: #{tpu_custom_call.1} parent=1 // loop_footer
      %s15 = sadd.s32 1, %s11
    $region7: #{tpu_custom_call.1} parent=1 // loop_footer_branch
      %10 = sbr.rel target = $region3
    $region8: #{tpu_custom_call.1} parent=1 // loop_exit
      _
    %363 = vsyncpa [#allocation4], 1
    %s364 = scalar_lea.sflag [#allocation4], 1
    %365 = vsyncpa %s364, 1

</llo_original>
